<compile_context>
chip_gen: v7x
topology: tpu7x:2x2x1
jax: 0.10.0
libtpu: 0.0.40
codegen_flags: <defaults>
</compile_context>

<pallas_src>
import functools

import jax
import jax.numpy as jnp
from jax.experimental import pallas as pl
from jax.experimental.pallas import tpu as pltpu


def _round_up(x, m):
    return ((x + m - 1) // m) * m


@functools.lru_cache(maxsize=None)
def _vmem_budget_bytes():
    """Generation-aware scoped-VMEM budget (~48 MiB on v7x, ~96 MiB on v5e/v6e)."""
    cap = 64 * 1024 * 1024
    try:
        cap = int(getattr(pltpu.get_tpu_info(), "vmem_capacity_bytes", cap))
    except Exception:
        pass
    return int(max(32 * 1024 * 1024, min(cap * 3 // 4, 100 * 1024 * 1024)))


def _pad_rows(x, rows):
    if rows == x.shape[0]:
        return x
    return jnp.pad(x, ((0, rows - x.shape[0]), (0, 0)))


# ----------------------------------------------------------------------------
# Kernel 1: per-node logits  score[n] = sum_c z[n, c] * w[0, c] + b
# ----------------------------------------------------------------------------
def node_score_kernel(z_ref, w_ref, b_ref, out_ref):
    # z_ref: (TILE_N, C) native dtype; w_ref: (1, C) f32; b_ref: (1, 1) f32 (SMEM)
    # out_ref: (TILE_N, 1) f32
    z = z_ref[...].astype(jnp.float32)   # in-kernel upcast: free VPU filler, no HBM copy
    w = w_ref[...]
    # VPU multiply + XLU cross-lane reduce; no N=1 MXU matmul, no concat.
    out_ref[...] = jnp.sum(z * w, axis=1, keepdims=True) + b_ref[0, 0]


def _node_scores(z, w_half, b, *, vmem_limit):
    """z: (N, C) float dtype; w_half: (1, C) f32; b: (1, 1) f32 -> (N_pad, 1) f32."""
    N, C = z.shape
    itemsize = jnp.dtype(z.dtype).itemsize
    # Per-row VMEM working set: 2 double-buffered z blocks (native dtype) + f32
    # upcast/product temps + 2 double-buffered (TILE_N, 1) out blocks (lane-padded
    # to 128 lanes in VMEM).
    per_row = 2 * C * itemsize + 8 * C + 2 * 128 * 4
    cap_rows = max(8, (vmem_limit // 3) // per_row)
    target_rows = max(8, (2 * 1024 * 1024) // max(C * itemsize, 1))  # ~2 MiB of z / step
    tile_n = min(_round_up(N, 8), _round_up(min(cap_rows, target_rows), 8))
    n_pad = _round_up(N, tile_n)
    if n_pad != N:
        z = jnp.pad(z, ((0, n_pad - N), (0, 0)))

    return pl.pallas_call(
        node_score_kernel,
        out_shape=jax.ShapeDtypeStruct((n_pad, 1), jnp.float32),
        grid=(n_pad // tile_n,),
        in_specs=[
            pl.BlockSpec((tile_n, C), lambda i: (i, 0)),
            pl.BlockSpec((1, C), lambda i: (0, 0)),
            pl.BlockSpec(memory_space=pltpu.MemorySpace.SMEM),
        ],
        out_specs=pl.BlockSpec((tile_n, 1), lambda i: (i, 0)),
        compiler_params=pltpu.CompilerParams(
            dimension_semantics=("parallel",),
            vmem_limit_bytes=vmem_limit,
        ),
    )(z, w_half, b)


# ----------------------------------------------------------------------------
# Kernel 2: per-edge score gather + add + sigmoid (edge-tiled, lane-dense out)
# ----------------------------------------------------------------------------
def edge_score_kernel(src_ref, tgt_ref, sp_ref, sd_ref, out_ref, *, chunk_p, chunk_d):
    # src_ref/tgt_ref: (1, TILE_E) int32; sp_ref: (Np_pad, 1) f32; sd_ref: (Nd_pad, 1) f32
    # out_ref: (1, TILE_E)
    src = src_ref[...]
    tgt = tgt_ref[...]
    te = src.shape[1]

    def gather(score_ref, idx, chunk):
        # sum_n [idx == n] * score[n], chunked over the node (sublane) axis so the
        # live intermediates stay (chunk, TILE_E) (~2 MiB) instead of (N_pad, TILE_E).
        n_pad = score_ref.shape[0]
        n_chunks = n_pad // chunk
        iota = jax.lax.broadcasted_iota(jnp.int32, (chunk, te), 0)  # hoisted out of loop

        def body(j, acc):
            s = score_ref[pl.ds(j * chunk, chunk), :]     # (chunk, 1) scores
            hit = iota == (idx - j * chunk)                # (chunk, TILE_E) match mask
            return acc + jnp.sum(jnp.where(hit, s, 0.0), axis=0, keepdims=True)

        acc0 = jnp.zeros((1, te), jnp.float32)
        if n_chunks == 1:
            return body(0, acc0)
        return jax.lax.fori_loop(0, n_chunks, body, acc0, unroll=(n_chunks <= 8))

    s_src = gather(sp_ref, src, chunk_p)   # bias already folded into the protein side
    s_tgt = gather(sd_ref, tgt, chunk_d)
    out_ref[...] = jax.nn.sigmoid(s_src + s_tgt).astype(out_ref.dtype)


@functools.partial(jax.jit, static_argnames=("edge_tile",))
def link_predictor_forward(z_protein, z_drug_class, edge_label_index, weight, bias,
                           *, edge_tile=16384):
    """weight: (1, 2C) torch-layout Linear weight; bias: (1,)."""
    Np, C = z_protein.shape
    Nd = z_drug_class.shape[0]
    E = edge_label_index.shape[1]
    assert weight.shape == (1, 2 * C)

    out_dtype = jnp.promote_types(z_protein.dtype, weight.dtype)
    vmem_limit = _vmem_budget_bytes()

    w = weight.astype(jnp.float32)
    w_src = w[:, :C]                                   # (1, C)
    w_tgt = w[:, C:]                                   # (1, C)
    b = bias.reshape(1, 1).astype(jnp.float32)         # (1, 1) -> SMEM
    zero_b = jnp.zeros((1, 1), jnp.float32)

    # Per-node logits (bias folded into the protein side only). Embeddings stream
    # in their native dtype; the upcast happens inside the kernel.
    sp = _node_scores(z_protein, w_src, b, vmem_limit=vmem_limit)          # (Np_pad, 1)
    sd = _node_scores(z_drug_class, w_tgt, zero_b, vmem_limit=vmem_limit)  # (Nd_pad, 1)

    # Edge tiling: lane-dense (1, TILE_E) tiles. Force >= 2 grid steps for mid-size
    # E so v7x's two TensorCores both get sharded work ("parallel" edge axis).
    e_128 = _round_up(E, 128)
    n_steps = max(2, pl.cdiv(e_128, edge_tile)) if e_128 >= 256 else 1
    tile_e = _round_up(pl.cdiv(e_128, n_steps), 128)
    e_pad = tile_e * n_steps

    src = jnp.pad(edge_label_index[0].astype(jnp.int32), (0, e_pad - E)).reshape(1, e_pad)
    tgt = jnp.pad(edge_label_index[1].astype(jnp.int32), (0, e_pad - E)).reshape(1, e_pad)

    # Node-chunk sizes bound live (chunk, TILE_E) f32 intermediates to ~2 MiB each.
    chunk_cap = max(8, ((1 << 19) // tile_e) // 8 * 8)
    chunk_p = min(chunk_cap, _round_up(Np, 8))
    chunk_d = min(chunk_cap, _round_up(Nd, 8))
    sp = _pad_rows(sp, _round_up(sp.shape[0], chunk_p))
    sd = _pad_rows(sd, _round_up(sd.shape[0], chunk_d))

    kernel = functools.partial(edge_score_kernel, chunk_p=chunk_p, chunk_d=chunk_d)
    out = pl.pallas_call(
        kernel,
        out_shape=jax.ShapeDtypeStruct((1, e_pad), out_dtype),
        grid=(n_steps,),
        in_specs=[
            pl.BlockSpec((1, tile_e), lambda i: (0, i)),   # src tile (streamed)
            pl.BlockSpec((1, tile_e), lambda i: (0, i)),   # tgt tile (streamed)
            pl.BlockSpec(sp.shape, lambda i: (0, 0)),      # sp resident across grid
            pl.BlockSpec(sd.shape, lambda i: (0, 0)),      # sd resident across grid
        ],
        out_specs=pl.BlockSpec((1, tile_e), lambda i: (0, i)),
        compiler_params=pltpu.CompilerParams(
            dimension_semantics=("parallel",),             # shard edge loop on v7x
            vmem_limit_bytes=vmem_limit,
        ),
    )(src, tgt, sp, sd)

    # torch .squeeze(): drop all size-1 dims.
    return jnp.squeeze(out[0, :E])


def _reference(z_protein, z_drug_class, edge_label_index, weight, bias):
    src = z_protein[edge_label_index[0]]
    tgt = z_drug_class[edge_label_index[1]]
    feat = jnp.concatenate([src, tgt], axis=-1)
    return jnp.squeeze(jax.nn.sigmoid(feat @ weight.T + bias))


if __name__ == "__main__":
    key = jax.random.PRNGKey(0)
    k1, k2, k3, k4, k5, k6 = jax.random.split(key, 6)

    in_channels = 32
    num_proteins = 16
    num_drug_classes = 8
    num_edges = 8

    z_protein = jax.random.normal(k1, (num_proteins, in_channels), dtype=jnp.float32)
    z_drug_class = jax.random.normal(k2, (num_drug_classes, in_channels), dtype=jnp.float32)
    edge_label_index = jnp.stack(
        [
            jax.random.randint(k3, (num_edges,), 0, num_proteins),
            jax.random.randint(k4, (num_edges,), 0, num_drug_classes),
        ],
        axis=0,
    ).astype(jnp.int32)  # (2, E)

    # Deterministic torch-style Linear init: U(-1/sqrt(fan_in), 1/sqrt(fan_in)).
    bound = 1.0 / jnp.sqrt(2.0 * in_channels)
    weight = jax.random.uniform(k5, (1, 2 * in_channels), jnp.float32, -bound, bound)
    bias = jax.random.uniform(k6, (1,), jnp.float32, -bound, bound)

    out = link_predictor_forward(z_protein, z_drug_class, edge_label_index, weight, bias)
    out = jax.block_until_ready(out)

    ref = _reference(z_protein, z_drug_class, edge_label_index, weight, bias)
    assert out.shape == (num_edges,), out.shape
    assert jnp.allclose(out, ref, atol=1e-5, rtol=1e-5)

    print("KERNEL_OK")
</pallas_src>

<mosaic_0001>
module attributes {stable_mosaic.version = 11 : i64} {
  func.func @node_score_kernel(%arg0: i32, %arg1: memref<16x32xf32, #tpu.memory_space<vmem>>, %arg2: memref<1x32xf32, #tpu.memory_space<vmem>>, %arg3: memref<1x1xf32, #tpu.memory_space<smem>>, %arg4: memref<16x1xf32, #tpu.memory_space<vmem>>) attributes {dimension_semantics = [#tpu.dimension_semantics<parallel>], iteration_bounds = array<i64: 1>, scalar_prefetch = 0 : i64, scratch_operands = 0 : i64, tpu.core_type = #tpu.core_type<tc>, window_params = [{transform_indices = @transform_0, window_bounds = array<i64: 16, 32>}, {pipeline_mode = #tpu.pipeline_mode<synchronous>, transform_indices = @transform_1, window_bounds = array<i64: 1, 32>}, {transform_indices = @transform_2, window_bounds = array<i64: 1, 1>}, {transform_indices = @transform_3, window_bounds = array<i64: 16, 1>}]} {
    %c0 = arith.constant 0 : index
    %c0_0 = arith.constant 0 : index
    %0 = vector.load %arg1[%c0, %c0_0] : memref<16x32xf32, #tpu.memory_space<vmem>>, vector<16x32xf32>
    %c0_1 = arith.constant 0 : index
    %c0_2 = arith.constant 0 : index
    %1 = vector.load %arg2[%c0_1, %c0_2] : memref<1x32xf32, #tpu.memory_space<vmem>>, vector<1x32xf32>
    %2 = vector.broadcast %1 : vector<1x32xf32> to vector<16x32xf32>
    %3 = arith.mulf %0, %2 : vector<16x32xf32>
    %cst = arith.constant dense<0.000000e+00> : vector<16xf32>
    %4 = vector.multi_reduction <add>, %3, %cst [1] : vector<16x32xf32> to vector<16xf32>
    %5 = vector.shape_cast %4 : vector<16xf32> to vector<16x1xf32>
    %c0_3 = arith.constant 0 : index
    %c0_4 = arith.constant 0 : index
    %6 = memref.load %arg3[%c0_3, %c0_4] : memref<1x1xf32, #tpu.memory_space<smem>>
    %7 = vector.broadcast %6 : f32 to vector<16x1xf32>
    %8 = arith.addf %5, %7 : vector<16x1xf32>
    %c0_5 = arith.constant 0 : index
    %c0_6 = arith.constant 0 : index
    %9 = vector.load %arg4[%c0_5, %c0_6] : memref<16x1xf32, #tpu.memory_space<vmem>>, vector<16x1xf32>
    tpu.vector_store %arg4[%c0_5, %c0_6], %8 {strides = array<i32>} : memref<16x1xf32, #tpu.memory_space<vmem>>, vector<16x1xf32>,
    return
  }
  func.func @transform_0(%arg0: i32) -> (i32, i32) {
    %c0_i32 = arith.constant 0 : i32
    %c0_i32_0 = arith.constant 0 : i32
    return %arg0, %c0_i32 : i32, i32
  }
  func.func @transform_1(%arg0: i32) -> (i32, i32) {
    %c0_i32 = arith.constant 0 : i32
    %c0_i32_0 = arith.constant 0 : i32
    %c0_i32_1 = arith.constant 0 : i32
    return %c0_i32, %c0_i32_0 : i32, i32
  }
  func.func @transform_2(%arg0: i32) -> (i32, i32) {
    %c0_i32 = arith.constant 0 : i32
    %c0_i32_0 = arith.constant 0 : i32
    %c0_i32_1 = arith.constant 0 : i32
    return %c0_i32, %c0_i32_0 : i32, i32
  }
  func.func @transform_3(%arg0: i32) -> (i32, i32) {
    %c0_i32 = arith.constant 0 : i32
    %c0_i32_0 = arith.constant 0 : i32
    return %arg0, %c0_i32 : i32, i32
  }
}

module attributes {stable_mosaic.version = 11 : i64} {
  func.func @node_score_kernel(%arg0: i32, %arg1: memref<8x32xf32, #tpu.memory_space<vmem>>, %arg2: memref<1x32xf32, #tpu.memory_space<vmem>>, %arg3: memref<1x1xf32, #tpu.memory_space<smem>>, %arg4: memref<8x1xf32, #tpu.memory_space<vmem>>) attributes {dimension_semantics = [#tpu.dimension_semantics<parallel>], iteration_bounds = array<i64: 1>, scalar_prefetch = 0 : i64, scratch_operands = 0 : i64, tpu.core_type = #tpu.core_type<tc>, window_params = [{transform_indices = @transform_0, window_bounds = array<i64: 8, 32>}, {pipeline_mode = #tpu.pipeline_mode<synchronous>, transform_indices = @transform_1, window_bounds = array<i64: 1, 32>}, {transform_indices = @transform_2, window_bounds = array<i64: 1, 1>}, {transform_indices = @transform_3, window_bounds = array<i64: 8, 1>}]} {
    %c0 = arith.constant 0 : index
    %c0_0 = arith.constant 0 : index
    %0 = vector.load %arg1[%c0, %c0_0] : memref<8x32xf32, #tpu.memory_space<vmem>>, vector<8x32xf32>
    %c0_1 = arith.constant 0 : index
    %c0_2 = arith.constant 0 : index
    %1 = vector.load %arg2[%c0_1, %c0_2] : memref<1x32xf32, #tpu.memory_space<vmem>>, vector<1x32xf32>
    %2 = vector.broadcast %1 : vector<1x32xf32> to vector<8x32xf32>
    %3 = arith.mulf %0, %2 : vector<8x32xf32>
    %cst = arith.constant dense<0.000000e+00> : vector<8xf32>
    %4 = vector.multi_reduction <add>, %3, %cst [1] : vector<8x32xf32> to vector<8xf32>
    %5 = vector.shape_cast %4 : vector<8xf32> to vector<8x1xf32>
    %c0_3 = arith.constant 0 : index
    %c0_4 = arith.constant 0 : index
    %6 = memref.load %arg3[%c0_3, %c0_4] : memref<1x1xf32, #tpu.memory_space<smem>>
    %7 = vector.broadcast %6 : f32 to vector<8x1xf32>
    %8 = arith.addf %5, %7 : vector<8x1xf32>
    %c0_5 = arith.constant 0 : index
    %c0_6 = arith.constant 0 : index
    %9 = vector.load %arg4[%c0_5, %c0_6] : memref<8x1xf32, #tpu.memory_space<vmem>>, vector<8x1xf32>
    tpu.vector_store %arg4[%c0_5, %c0_6], %8 {strides = array<i32>} : memref<8x1xf32, #tpu.memory_space<vmem>>, vector<8x1xf32>,
    return
  }
  func.func @transform_0(%arg0: i32) -> (i32, i32) {
    %c0_i32 = arith.constant 0 : i32
    %c0_i32_0 = arith.constant 0 : i32
    return %arg0, %c0_i32 : i32, i32
  }
  func.func @transform_1(%arg0: i32) -> (i32, i32) {
    %c0_i32 = arith.constant 0 : i32
    %c0_i32_0 = arith.constant 0 : i32
    %c0_i32_1 = arith.constant 0 : i32
    return %c0_i32, %c0_i32_0 : i32, i32
  }
  func.func @transform_2(%arg0: i32) -> (i32, i32) {
    %c0_i32 = arith.constant 0 : i32
    %c0_i32_0 = arith.constant 0 : i32
    %c0_i32_1 = arith.constant 0 : i32
    return %c0_i32, %c0_i32_0 : i32, i32
  }
  func.func @transform_3(%arg0: i32) -> (i32, i32) {
    %c0_i32 = arith.constant 0 : i32
    %c0_i32_0 = arith.constant 0 : i32
    return %arg0, %c0_i32 : i32, i32
  }
}

module attributes {stable_mosaic.version = 11 : i64} {
  func.func @edge_score_kernel(%arg0: i32, %arg1: memref<1x128xi32, #tpu.memory_space<vmem>>, %arg2: memref<1x128xi32, #tpu.memory_space<vmem>>, %arg3: memref<16x1xf32, #tpu.memory_space<vmem>>, %arg4: memref<8x1xf32, #tpu.memory_space<vmem>>, %arg5: memref<1x128xf32, #tpu.memory_space<vmem>>) attributes {dimension_semantics = [#tpu.dimension_semantics<parallel>], iteration_bounds = array<i64: 1>, scalar_prefetch = 0 : i64, scratch_operands = 0 : i64, tpu.core_type = #tpu.core_type<tc>, window_params = [{transform_indices = @transform_0, window_bounds = array<i64: 1, 128>}, {transform_indices = @transform_1, window_bounds = array<i64: 1, 128>}, {pipeline_mode = #tpu.pipeline_mode<synchronous>, transform_indices = @transform_2, window_bounds = array<i64: 16, 1>}, {pipeline_mode = #tpu.pipeline_mode<synchronous>, transform_indices = @transform_3, window_bounds = array<i64: 8, 1>}, {transform_indices = @transform_4, window_bounds = array<i64: 1, 128>}]} {
    %c0 = arith.constant 0 : index
    %c0_0 = arith.constant 0 : index
    %0 = vector.load %arg1[%c0, %c0_0] : memref<1x128xi32, #tpu.memory_space<vmem>>, vector<1x128xi32>
    %c0_1 = arith.constant 0 : index
    %c0_2 = arith.constant 0 : index
    %1 = vector.load %arg2[%c0_1, %c0_2] : memref<1x128xi32, #tpu.memory_space<vmem>>, vector<1x128xi32>
    %2 = tpu.iota {dimensions = array<i32: 0>} : vector<16x128xi32>
    %cst = arith.constant 0.000000e+00 : f32
    %3 = vector.broadcast %cst : f32 to vector<1x128xf32>
    %c0_3 = arith.constant 0 : index
    %c0_4 = arith.constant 0 : index
    %4 = vector.load %arg3[%c0_3, %c0_4] : memref<16x1xf32, #tpu.memory_space<vmem>>, vector<16x1xf32>
    %c0_i32 = arith.constant 0 : i32
    %5 = vector.broadcast %c0_i32 : i32 to vector<1x128xi32>
    %6 = arith.subi %0, %5 : vector<1x128xi32>
    %7 = vector.broadcast %6 : vector<1x128xi32> to vector<16x128xi32>
    %8 = arith.cmpi eq, %2, %7 : vector<16x128xi32>
    %cst_5 = arith.constant 0.000000e+00 : f32
    %9 = vector.shape_cast %4 : vector<16x1xf32> to vector<16x1xf32>
    %10 = vector.broadcast %9 : vector<16x1xf32> to vector<16x128xf32>
    %11 = vector.broadcast %cst_5 : f32 to vector<16x128xf32>
    %12 = arith.select %8, %10, %11 : vector<16x128xi1>, vector<16x128xf32>
    %cst_6 = arith.constant dense<0.000000e+00> : vector<128xf32>
    %13 = vector.multi_reduction <add>, %12, %cst_6 [0] : vector<16x128xf32> to vector<128xf32>
    %14 = vector.shape_cast %13 : vector<128xf32> to vector<1x128xf32>
    %15 = arith.addf %3, %14 : vector<1x128xf32>
    %16 = tpu.iota {dimensions = array<i32: 0>} : vector<8x128xi32>
    %cst_7 = arith.constant 0.000000e+00 : f32
    %17 = vector.broadcast %cst_7 : f32 to vector<1x128xf32>
    %c0_8 = arith.constant 0 : index
    %c0_9 = arith.constant 0 : index
    %18 = vector.load %arg4[%c0_8, %c0_9] : memref<8x1xf32, #tpu.memory_space<vmem>>, vector<8x1xf32>
    %c0_i32_10 = arith.constant 0 : i32
    %19 = vector.broadcast %c0_i32_10 : i32 to vector<1x128xi32>
    %20 = arith.subi %1, %19 : vector<1x128xi32>
    %21 = vector.broadcast %20 : vector<1x128xi32> to vector<8x128xi32>
    %22 = arith.cmpi eq, %16, %21 : vector<8x128xi32>
    %cst_11 = arith.constant 0.000000e+00 : f32
    %23 = vector.shape_cast %18 : vector<8x1xf32> to vector<8x1xf32>
    %24 = vector.broadcast %23 : vector<8x1xf32> to vector<8x128xf32>
    %25 = vector.broadcast %cst_11 : f32 to vector<8x128xf32>
    %26 = arith.select %22, %24, %25 : vector<8x128xi1>, vector<8x128xf32>
    %cst_12 = arith.constant dense<0.000000e+00> : vector<128xf32>
    %27 = vector.multi_reduction <add>, %26, %cst_12 [0] : vector<8x128xf32> to vector<128xf32>
    %28 = vector.shape_cast %27 : vector<128xf32> to vector<1x128xf32>
    %29 = arith.addf %17, %28 : vector<1x128xf32>
    %30 = arith.addf %15, %29 : vector<1x128xf32>
    %31 = arith.negf %30 : vector<1x128xf32>
    %32 = math.exp %31 : vector<1x128xf32>
    %cst_13 = arith.constant 1.000000e+00 : f32
    %33 = vector.broadcast %cst_13 : f32 to vector<1x128xf32>
    %34 = arith.addf %33, %32 : vector<1x128xf32>
    %35 = arith.divf %33, %34 : vector<1x128xf32>
    %c0_14 = arith.constant 0 : index
    %c0_15 = arith.constant 0 : index
    %36 = vector.load %arg5[%c0_14, %c0_15] : memref<1x128xf32, #tpu.memory_space<vmem>>, vector<1x128xf32>
    tpu.vector_store %arg5[%c0_14, %c0_15], %35 {strides = array<i32>} : memref<1x128xf32, #tpu.memory_space<vmem>>, vector<1x128xf32>,
    return
  }
  func.func @transform_0(%arg0: i32) -> (i32, i32) {
    %c0_i32 = arith.constant 0 : i32
    %c0_i32_0 = arith.constant 0 : i32
    return %c0_i32, %arg0 : i32, i32
  }
  func.func @transform_1(%arg0: i32) -> (i32, i32) {
    %c0_i32 = arith.constant 0 : i32
    %c0_i32_0 = arith.constant 0 : i32
    return %c0_i32, %arg0 : i32, i32
  }
  func.func @transform_2(%arg0: i32) -> (i32, i32) {
    %c0_i32 = arith.constant 0 : i32
    %c0_i32_0 = arith.constant 0 : i32
    %c0_i32_1 = arith.constant 0 : i32
    return %c0_i32, %c0_i32_0 : i32, i32
  }
  func.func @transform_3(%arg0: i32) -> (i32, i32) {
    %c0_i32 = arith.constant 0 : i32
    %c0_i32_0 = arith.constant 0 : i32
    %c0_i32_1 = arith.constant 0 : i32
    return %c0_i32, %c0_i32_0 : i32, i32
  }
  func.func @transform_4(%arg0: i32) -> (i32, i32) {
    %c0_i32 = arith.constant 0 : i32
    %c0_i32_0 = arith.constant 0 : i32
    return %c0_i32, %arg0 : i32, i32
  }
}

</mosaic_0001>

<llo_original>
// kernel: link_predictor_forward.3
$region0: #{link_predictor_forward.3}
  #allocation0 [shape = 'u32[]', space=smem, size = 0x4, offset = 0x4, fixed_abs, tag = 'smem constant byte address 0x4 - core index']
  #allocation1 [shape = 'u32[144,128]{1,0:T(1,128)}', space=vmem, size = 0x12000, scoped, tag = 'internal scratch']
  #allocation2 [shape = 'f32[1,1]{1,0:T(1,128)S(6)}', space=smem, size = 0x200, scoped, tag = 'scoped memory for link_predictor_forward.3']
  %s0 = inlined_call_operand.vmem [shape: f32[16,32], index: 0, kind: input, shape index: {}]
  %s1 = inlined_call_operand.vmem [shape: f32[1,32], index: 1, kind: input, shape index: {}]
  %s2 = inlined_call_operand.<no memory space> [shape: f32[1,1], index: 2, kind: input, shape index: {}]
  %s3 = inlined_call_operand.vmem [shape: f32[16,1], index: 3, kind: output, shape index: {}]
  %s4 = sld [smem:[#allocation0]]
  $region22: #{link_predictor_forward.3} parent=0
    _
  %s6 = ssub.s32 1, %s4
  %s7 = scalar_select 0, %s6, %s4
  %8 = sst [smem:[#allocation2]] %s2
  // Predicated region
  $region2: #{link_predictor_forward.3} parent=0 // pred_check
    _
  $region3: #{link_predictor_forward.3} parent=0 // pred_check_branch
    %10 = sbr.rel (0) target = $region5
  $region4: #{link_predictor_forward.3} parent=0 // pred_region
    _
  $region5: #{link_predictor_forward.3} parent=0 // pred_fallthru
    _
  // Predicated region
  $region6: #{link_predictor_forward.3} parent=0 // pred_check
    _
  $region7: #{link_predictor_forward.3} parent=0 // pred_check_branch
    %12 = sbr.rel (0) target = $region9
  $region8: #{link_predictor_forward.3} parent=0 // pred_region
    _
  $region9: #{link_predictor_forward.3} parent=0 // pred_fallthru
    _
  // Predicated region
  $region10: #{link_predictor_forward.3} parent=0 // pred_check
    _
  $region11: #{link_predictor_forward.3} parent=0 // pred_check_branch
    %14 = sbr.rel (0) target = $region13
  $region12: #{link_predictor_forward.3} parent=0 // pred_region
    _
  $region13: #{link_predictor_forward.3} parent=0 // pred_fallthru
    _
  %v15 = vld [vmem:[%s0] sm:$0xff]
  %v16 = vld [vmem:[%s0 + $0x8] sm:$0xff]
  %v17 = vld [vmem:[%s1] sm:$0x1]
  %v19 = vlaneseq
  %v20 = vshrl.u32 %v19, 7
  %v21 = vsub.s32 0, %v20
  %v22 = vrot.slane %v17, %v21
  %v24 = vmul.f32 %v15, %v22
  %v25 = vmul.f32 %v16, %v22
  %vm26 = vcmask 261120
  %v27 = vsel %vm26, %v24, 0.0
  %28 = vadd.xlane.f32.xlu0 %v27
  %v29 = vpop.xlane.xlu0 %28
  %v30 = vsel %vm26, %v25, 0.0
  %31 = vadd.xlane.f32.xlu0 %v30
  %v32 = vpop.xlane.xlu0 %31
  %s33 = sld [smem:[#allocation2]]
  %v34 = vstv %s33
  %v35 = vadd.f32 %v29, %v34
  %v36 = vadd.f32 %v32, %v34
  %vm37 = vcmask 7168
  %38 = vst.msk [vmem:[%s3] sm:$0xff] %vm37, %v35
  %39 = vst.msk [vmem:[%s3 + $0x8] sm:$0xff] %vm37, %v36
  // Predicated region
  $region14: #{link_predictor_forward.3} parent=0 // pred_check
    _
  $region15: #{link_predictor_forward.3} parent=0 // pred_check_branch
    %41 = sbr.rel (0) target = $region17
  $region16: #{link_predictor_forward.3} parent=0 // pred_region
    _
  $region17: #{link_predictor_forward.3} parent=0 // pred_fallthru
    _
  // Predicated region
  $region18: #{link_predictor_forward.3} parent=0 // pred_check
    _
  $region19: #{link_predictor_forward.3} parent=0 // pred_check_branch
    %43 = sbr.rel (0) target = $region21
  $region20: #{link_predictor_forward.3} parent=0 // pred_region
    _
  $region21: #{link_predictor_forward.3} parent=0 // pred_fallthru
    _

// kernel: link_predictor_forward.4
$region0: #{link_predictor_forward.4}
  #allocation0 [shape = 'u32[]', space=smem, size = 0x4, offset = 0x4, fixed_abs, tag = 'smem constant byte address 0x4 - core index']
  #allocation1 [shape = 'u32[144,128]{1,0:T(1,128)}', space=vmem, size = 0x12000, scoped, tag = 'internal scratch']
  #allocation2 [shape = 'f32[1,1]{1,0:T(1,128)S(6)}', space=smem, size = 0x200, scoped, tag = 'scoped memory for link_predictor_forward.4']
  %s0 = inlined_call_operand.vmem [shape: f32[8,32], index: 0, kind: input, shape index: {}]
  %s1 = inlined_call_operand.vmem [shape: f32[1,32], index: 1, kind: input, shape index: {}]
  %s2 = inlined_call_operand.<no memory space> [shape: f32[1,1], index: 2, kind: input, shape index: {}]
  %s3 = inlined_call_operand.vmem [shape: f32[8,1], index: 3, kind: output, shape index: {}]
  %s4 = sld [smem:[#allocation0]]
  $region22: #{link_predictor_forward.4} parent=0
    _
  %s6 = ssub.s32 1, %s4
  %s7 = scalar_select 0, %s6, %s4
  %8 = sst [smem:[#allocation2]] %s2
  // Predicated region
  $region2: #{link_predictor_forward.4} parent=0 // pred_check
    _
  $region3: #{link_predictor_forward.4} parent=0 // pred_check_branch
    %10 = sbr.rel (0) target = $region5
  $region4: #{link_predictor_forward.4} parent=0 // pred_region
    _
  $region5: #{link_predictor_forward.4} parent=0 // pred_fallthru
    _
  // Predicated region
  $region6: #{link_predictor_forward.4} parent=0 // pred_check
    _
  $region7: #{link_predictor_forward.4} parent=0 // pred_check_branch
    %12 = sbr.rel (0) target = $region9
  $region8: #{link_predictor_forward.4} parent=0 // pred_region
    _
  $region9: #{link_predictor_forward.4} parent=0 // pred_fallthru
    _
  // Predicated region
  $region10: #{link_predictor_forward.4} parent=0 // pred_check
    _
  $region11: #{link_predictor_forward.4} parent=0 // pred_check_branch
    %14 = sbr.rel (0) target = $region13
  $region12: #{link_predictor_forward.4} parent=0 // pred_region
    _
  $region13: #{link_predictor_forward.4} parent=0 // pred_fallthru
    _
  %v15 = vld [vmem:[%s0] sm:$0xff]
  %v16 = vld [vmem:[%s1] sm:$0x1]
  %v18 = vlaneseq
  %v19 = vshrl.u32 %v18, 7
  %v20 = vsub.s32 0, %v19
  %v21 = vrot.slane %v16, %v20
  %v23 = vmul.f32 %v15, %v21
  %vm24 = vcmask 261120
  %v25 = vsel %vm24, %v23, 0.0
  %26 = vadd.xlane.f32.xlu0 %v25
  %v27 = vpop.xlane.xlu0 %26
  %s28 = sld [smem:[#allocation2]]
  %v29 = vstv %s28
  %v30 = vadd.f32 %v27, %v29
  %vm31 = vcmask 7168
  %32 = vst.msk [vmem:[%s3] sm:$0xff] %vm31, %v30
  // Predicated region
  $region14: #{link_predictor_forward.4} parent=0 // pred_check
    _
  $region15: #{link_predictor_forward.4} parent=0 // pred_check_branch
    %34 = sbr.rel (0) target = $region17
  $region16: #{link_predictor_forward.4} parent=0 // pred_region
    _
  $region17: #{link_predictor_forward.4} parent=0 // pred_fallthru
    _
  // Predicated region
  $region18: #{link_predictor_forward.4} parent=0 // pred_check
    _
  $region19: #{link_predictor_forward.4} parent=0 // pred_check_branch
    %36 = sbr.rel (0) target = $region21
  $region20: #{link_predictor_forward.4} parent=0 // pred_region
    _
  $region21: #{link_predictor_forward.4} parent=0 // pred_fallthru
    _

// kernel: link_predictor_forward.5
$region0: #{link_predictor_forward.5}
  #allocation0 [shape = 'u32[]', space=smem, size = 0x4, offset = 0x4, fixed_abs, tag = 'smem constant byte address 0x4 - core index']
  #allocation1 [shape = 'u32[144,128]{1,0:T(1,128)}', space=vmem, size = 0x12000, scoped, tag = 'internal scratch']
  %s0 = inlined_call_operand.vmem [shape: s32[1,128], index: 0, kind: input, shape index: {}]
  %s1 = inlined_call_operand.vmem [shape: s32[1,128], index: 1, kind: input, shape index: {}]
  %s2 = inlined_call_operand.vmem [shape: f32[16,1], index: 2, kind: input, shape index: {}]
  %s3 = inlined_call_operand.vmem [shape: f32[8,1], index: 3, kind: input, shape index: {}]
  %s4 = inlined_call_operand.vmem [shape: f32[1,128], index: 4, kind: output, shape index: {}]
  %s5 = sld [smem:[#allocation0]]
  $region26: #{link_predictor_forward.5} parent=0
    _
  %s7 = ssub.s32 1, %s5
  %s8 = scalar_select 0, %s7, %s5
  // Predicated region
  $region2: #{link_predictor_forward.5} parent=0 // pred_check
    _
  $region3: #{link_predictor_forward.5} parent=0 // pred_check_branch
    %10 = sbr.rel (0) target = $region5
  $region4: #{link_predictor_forward.5} parent=0 // pred_region
    _
  $region5: #{link_predictor_forward.5} parent=0 // pred_fallthru
    _
  // Predicated region
  $region6: #{link_predictor_forward.5} parent=0 // pred_check
    _
  $region7: #{link_predictor_forward.5} parent=0 // pred_check_branch
    %12 = sbr.rel (0) target = $region9
  $region8: #{link_predictor_forward.5} parent=0 // pred_region
    _
  $region9: #{link_predictor_forward.5} parent=0 // pred_fallthru
    _
  // Predicated region
  $region10: #{link_predictor_forward.5} parent=0 // pred_check
    _
  $region11: #{link_predictor_forward.5} parent=0 // pred_check_branch
    %14 = sbr.rel (0) target = $region13
  $region12: #{link_predictor_forward.5} parent=0 // pred_region
    _
  $region13: #{link_predictor_forward.5} parent=0 // pred_fallthru
    _
  // Predicated region
  $region14: #{link_predictor_forward.5} parent=0 // pred_check
    _
  $region15: #{link_predictor_forward.5} parent=0 // pred_check_branch
    %16 = sbr.rel (0) target = $region17
  $region16: #{link_predictor_forward.5} parent=0 // pred_region
    _
  $region17: #{link_predictor_forward.5} parent=0 // pred_fallthru
    _
  %v17 = vld [vmem:[%s0] sm:$0x1]
  %v18 = vld [vmem:[%s1] sm:$0x1]
  %v19 = vlaneseq
  %v20 = vshrl.u32 %v19, 7
  %v21 = vadd.s32 %v20, 8
  %v22 = vld [vmem:[%s2] sm:$0xff]
  %v23 = vld [vmem:[%s2 + $0x8] sm:$0xff]
  %v24 = vlaneseq
  %v25 = vshrl.u32 %v24, 7
  %v26 = vsub.s32 0, %v25
  %v27 = vrot.slane %v17, %v26
  %vm28 = vcmp.eq.s32.totalorder %v20, %v27
  %vm29 = vcmp.eq.s32.totalorder %v21, %v27
  %31 = vset.pattern.permute.xlu0 0
  %32 = vperm.xlu0 %31, %v22
  %v33 = vpop.permute.xlu0 %32
  %36 = vset.pattern.permute.xlu0 0
  %37 = vperm.xlu0 %36, %v23
  %v38 = vpop.permute.xlu0 %37
  %v40 = vsel %vm28, %v33, 0.0
  %v41 = vsel %vm29, %v38, 0.0
  %v42 = vadd.f32 %v40, %v41
  %v43 = vrot.slane %v42, 4
  %v44 = vadd.f32 %v42, %v43
  %v45 = vrot.slane %v44, 2
  %v46 = vadd.f32 %v44, %v45
  %v47 = vrot.slane %v46, 1
  %v48 = vadd.f32 %v46, %v47
  %v49 = vadd.f32 %v48, 0.0
  %v50 = vld [vmem:[%s3] sm:$0xff]
  %v51 = vlaneseq
  %v52 = vshrl.u32 %v51, 7
  %v53 = vsub.s32 0, %v52
  %v54 = vrot.slane %v18, %v53
  %vm55 = vcmp.eq.s32.totalorder %v20, %v54
  %57 = vset.pattern.permute.xlu0 0
  %58 = vperm.xlu0 %57, %v50
  %v59 = vpop.permute.xlu0 %58
  %v61 = vsel %vm55, %v59, 0.0
  %v62 = vrot.slane %v61, 4
  %v63 = vadd.f32 %v61, %v62
  %v64 = vrot.slane %v63, 2
  %v65 = vadd.f32 %v63, %v64
  %v66 = vrot.slane %v65, 1
  %v67 = vadd.f32 %v65, %v66
  %v68 = vadd.f32 %v67, 0.0
  %v69 = vadd.f32 %v49, %v68
  %v70 = vxor.u32 %v69, 2147483648
  %v71 = vmul.f32 %v70, 1.442695
  %v72 = vpow.pop %v71
  %v73 = vadd.f32 %v72, 1.0
  %v74 = vrcp.pop %v73
  %v75 = vmul.f32 1.0, %v74
  %76 = vst [vmem:[%s4] sm:$0x1] %v75
  // Predicated region
  $region18: #{link_predictor_forward.5} parent=0 // pred_check
    _
  $region19: #{link_predictor_forward.5} parent=0 // pred_check_branch
    %78 = sbr.rel (0) target = $region21
  $region20: #{link_predictor_forward.5} parent=0 // pred_region
    _
  $region21: #{link_predictor_forward.5} parent=0 // pred_fallthru
    _
  // Predicated region
  $region22: #{link_predictor_forward.5} parent=0 // pred_check
    _
  $region23: #{link_predictor_forward.5} parent=0 // pred_check_branch
    %80 = sbr.rel (0) target = $region25
  $region24: #{link_predictor_forward.5} parent=0 // pred_region
    _
  $region25: #{link_predictor_forward.5} parent=0 // pred_fallthru
    _

</llo_original>
